<compile_context>
chip_gen: v7x
topology: tpu7x:2x2x1
jax: 0.10.0
libtpu: 0.0.40
codegen_flags: <defaults>
</compile_context>

<pallas_src>
import jax
import jax.numpy as jnp
from jax.experimental import pallas as pl
from jax.experimental.pallas import tpu as pltpu


def _round_up(x, m):
    return (x + m - 1) // m * m


def _mlp_kernel(xt_ref, w1_ref, b1_ref, w2_ref, b2_ref, o_ref):
    # xt_ref: (D_pad, TILE_B)   one batch tile of x^T (batch on lanes)
    # w1_ref: (H_pad, D_pad)    first_layer.weight (torch (out, in) layout), padded
    # b1_ref: (H_pad, 1)        first_layer.bias
    # w2_ref: (H_pad, 1)        fc.weight^T
    # b2_ref: (1,)  SMEM        fc.bias (scalar)
    # o_ref : (1, TILE_B)       lane-dense output tile (y^T)

    # hidden^T = W1 @ x^T -> (H_pad, TILE_B); f32 accumulation on the MXU.
    h = jnp.dot(w1_ref[...], xt_ref[...], preferred_element_type=jnp.float32)
    h = h + b1_ref[...]                      # (H_pad, TILE_B) + (H_pad, 1)
    h = jnp.where(h >= 0, h, 0.01 * h)       # leaky_relu, negative_slope=0.01

    # fc has output width 1: VPU multiply + sublane reduce instead of a
    # 1-column MXU matmul.  Result is already lane-dense (1, TILE_B).
    out = jnp.sum(h * w2_ref[...], axis=0, keepdims=True)
    o_ref[...] = (out + b2_ref[0]).astype(o_ref.dtype)


def mlp_regression_forward(x, w1, b1, w2, b2, *, tile_b=None):
    """Forward pass of MLPRegression.

    x : (B, D) float32
    w1: (H, D)  first_layer.weight (torch layout)
    b1: (H,)    first_layer.bias
    w2: (1, H)  fc.weight (torch layout)
    b2: (1,)    fc.bias
    returns (B, 1)
    """
    B, D = x.shape
    H = w1.shape[0]

    D_pad = _round_up(D, 128)
    H_pad = _round_up(H, 128)

    if tile_b is None:
        # One grid step for small batches; cap the tile so x^T tile + hidden
        # tile stay tiny vs VMEM for large batches.
        tile_b = min(512, _round_up(B, 128))
    B_pad = _round_up(B, tile_b)

    dt = x.dtype
    # Wrapper-side layout plumbing: pad to MXU/vreg-friendly shapes and put the
    # batch on the lane axis.  Zero padding adds exactly zero to the output.
    xt = jnp.zeros((D_pad, B_pad), dt).at[:D, :B].set(x.T)
    w1p = jnp.zeros((H_pad, D_pad), dt).at[:H, :D].set(w1)
    b1p = jnp.zeros((H_pad, 1), dt).at[:H, 0].set(b1)
    w2p = jnp.zeros((H_pad, 1), dt).at[:H, 0].set(w2.reshape(H))
    b2p = b2.reshape(1).astype(dt)

    grid = (B_pad // tile_b,)
    out_t = pl.pallas_call(
        _mlp_kernel,
        out_shape=jax.ShapeDtypeStruct((1, B_pad), dt),
        grid=grid,
        in_specs=[
            # x^T streamed per batch tile ...
            pl.BlockSpec((D_pad, tile_b), lambda i: (0, i)),
            # ... weights/biases stay resident in VMEM (constant block index).
            pl.BlockSpec((H_pad, D_pad), lambda i: (0, 0)),
            pl.BlockSpec((H_pad, 1), lambda i: (0, 0)),
            pl.BlockSpec((H_pad, 1), lambda i: (0, 0)),
            # Scalar fc bias in SMEM: no padded (8,128) VMEM tile, no extra DMA.
            pl.BlockSpec(memory_space=pltpu.MemorySpace.SMEM),
        ],
        out_specs=pl.BlockSpec((1, tile_b), lambda i: (0, i)),
        compiler_params=pltpu.CompilerParams(
            dimension_semantics=("parallel",)),
    )(xt, w1p, b1p, w2p, b2p)

    # (1, B_pad) lane-dense slab -> (B, 1)
    return out_t[0, :B].reshape(B, 1)


def reference_forward(x, w1, b1, w2, b2):
    h = x @ w1.T + b1
    h = jnp.where(h >= 0, h, 0.01 * h)
    return h @ w2.T + b2


if __name__ == "__main__":
    key = jax.random.PRNGKey(0)
    k_x, k_w1, k_b1, k_w2, k_b2 = jax.random.split(key, 5)

    batch, input_dim, hidden_dim = 8, 32, 16

    x = jax.random.normal(k_x, (batch, input_dim), dtype=jnp.float32)

    # Deterministic synthetic parameters in torch.nn.Linear (out, in) layout.
    bound1 = 1.0 / (input_dim ** 0.5)
    w1 = jax.random.uniform(k_w1, (hidden_dim, input_dim), jnp.float32, -bound1, bound1)
    b1 = jax.random.uniform(k_b1, (hidden_dim,), jnp.float32, -bound1, bound1)
    bound2 = 1.0 / (hidden_dim ** 0.5)
    w2 = jax.random.uniform(k_w2, (1, hidden_dim), jnp.float32, -bound2, bound2)
    b2 = jax.random.uniform(k_b2, (1,), jnp.float32, -bound2, bound2)

    y = mlp_regression_forward(x, w1, b1, w2, b2)
    y = jax.block_until_ready(y)

    y_ref = reference_forward(x, w1, b1, w2, b2)
    assert y.shape == (batch, 1), y.shape
    assert jnp.allclose(y, y_ref, atol=1e-5, rtol=1e-5), "mismatch vs reference"

    print("KERNEL_OK")
</pallas_src>

<mosaic_0001>
module attributes {stable_mosaic.version = 11 : i64} {
  func.func @_mlp_kernel(%arg0: i32, %arg1: memref<128x128xf32, #tpu.memory_space<vmem>>, %arg2: memref<128x128xf32, #tpu.memory_space<vmem>>, %arg3: memref<128x1xf32, #tpu.memory_space<vmem>>, %arg4: memref<128x1xf32, #tpu.memory_space<vmem>>, %arg5: memref<1xf32, #tpu.memory_space<smem>>, %arg6: memref<1x128xf32, #tpu.memory_space<vmem>>) attributes {dimension_semantics = [#tpu.dimension_semantics<parallel>], iteration_bounds = array<i64: 1>, scalar_prefetch = 0 : i64, scratch_operands = 0 : i64, tpu.core_type = #tpu.core_type<tc>, window_params = [{transform_indices = @transform_0, window_bounds = array<i64: 128, 128>}, {pipeline_mode = #tpu.pipeline_mode<synchronous>, transform_indices = @transform_1, window_bounds = array<i64: 128, 128>}, {pipeline_mode = #tpu.pipeline_mode<synchronous>, transform_indices = @transform_2, window_bounds = array<i64: 128, 1>}, {pipeline_mode = #tpu.pipeline_mode<synchronous>, transform_indices = @transform_3, window_bounds = array<i64: 128, 1>}, {transform_indices = @transform_4, window_bounds = array<i64: 1>}, {transform_indices = @transform_5, window_bounds = array<i64: 1, 128>}]} {
    %c0 = arith.constant 0 : index
    %c0_0 = arith.constant 0 : index
    %0 = vector.load %arg2[%c0, %c0_0] : memref<128x128xf32, #tpu.memory_space<vmem>>, vector<128x128xf32>
    %c0_1 = arith.constant 0 : index
    %c0_2 = arith.constant 0 : index
    %1 = vector.load %arg1[%c0_1, %c0_2] : memref<128x128xf32, #tpu.memory_space<vmem>>, vector<128x128xf32>
    %cst = arith.constant dense<0.000000e+00> : vector<128x128xf32>
    %2 = tpu.matmul %0, %1, %cst {dimension_numbers = #tpu.dot_dimension_numbers<[1], [0], [0], [1], [0, 0, 1, 1], [], []>} : vector<128x128xf32>, vector<128x128xf32>, vector<128x128xf32> -> vector<128x128xf32>
    %c0_3 = arith.constant 0 : index
    %c0_4 = arith.constant 0 : index
    %3 = vector.load %arg3[%c0_3, %c0_4] : memref<128x1xf32, #tpu.memory_space<vmem>>, vector<128x1xf32>
    %4 = vector.broadcast %3 : vector<128x1xf32> to vector<128x128xf32>
    %5 = arith.addf %2, %4 : vector<128x128xf32>
    %cst_5 = arith.constant 0.000000e+00 : f32
    %6 = vector.broadcast %cst_5 : f32 to vector<128x128xf32>
    %7 = arith.cmpf oge, %5, %6 : vector<128x128xf32>
    %cst_6 = arith.constant 0.00999999977 : f32
    %8 = vector.broadcast %cst_6 : f32 to vector<128x128xf32>
    %9 = arith.mulf %8, %5 : vector<128x128xf32>
    %10 = arith.select %7, %5, %9 : vector<128x128xi1>, vector<128x128xf32>
    %c0_7 = arith.constant 0 : index
    %c0_8 = arith.constant 0 : index
    %11 = vector.load %arg4[%c0_7, %c0_8] : memref<128x1xf32, #tpu.memory_space<vmem>>, vector<128x1xf32>
    %12 = vector.broadcast %11 : vector<128x1xf32> to vector<128x128xf32>
    %13 = arith.mulf %10, %12 : vector<128x128xf32>
    %cst_9 = arith.constant dense<0.000000e+00> : vector<128xf32>
    %14 = vector.multi_reduction <add>, %13, %cst_9 [0] : vector<128x128xf32> to vector<128xf32>
    %15 = vector.shape_cast %14 : vector<128xf32> to vector<1x128xf32>
    %c0_10 = arith.constant 0 : index
    %16 = memref.load %arg5[%c0_10] : memref<1xf32, #tpu.memory_space<smem>>
    %17 = vector.broadcast %16 : f32 to vector<1x128xf32>
    %18 = arith.addf %15, %17 : vector<1x128xf32>
    %c0_11 = arith.constant 0 : index
    %c0_12 = arith.constant 0 : index
    %19 = vector.load %arg6[%c0_11, %c0_12] : memref<1x128xf32, #tpu.memory_space<vmem>>, vector<1x128xf32>
    tpu.vector_store %arg6[%c0_11, %c0_12], %18 {strides = array<i32>} : memref<1x128xf32, #tpu.memory_space<vmem>>, vector<1x128xf32>,
    return
  }
  func.func @transform_0(%arg0: i32) -> (i32, i32) {
    %c0_i32 = arith.constant 0 : i32
    %c0_i32_0 = arith.constant 0 : i32
    return %c0_i32, %arg0 : i32, i32
  }
  func.func @transform_1(%arg0: i32) -> (i32, i32) {
    %c0_i32 = arith.constant 0 : i32
    %c0_i32_0 = arith.constant 0 : i32
    %c0_i32_1 = arith.constant 0 : i32
    return %c0_i32, %c0_i32_0 : i32, i32
  }
  func.func @transform_2(%arg0: i32) -> (i32, i32) {
    %c0_i32 = arith.constant 0 : i32
    %c0_i32_0 = arith.constant 0 : i32
    %c0_i32_1 = arith.constant 0 : i32
    return %c0_i32, %c0_i32_0 : i32, i32
  }
  func.func @transform_3(%arg0: i32) -> (i32, i32) {
    %c0_i32 = arith.constant 0 : i32
    %c0_i32_0 = arith.constant 0 : i32
    %c0_i32_1 = arith.constant 0 : i32
    return %c0_i32, %c0_i32_0 : i32, i32
  }
  func.func @transform_4(%arg0: i32) -> i32 {
    %c0_i32 = arith.constant 0 : i32
    %c0_i32_0 = arith.constant 0 : i32
    return %c0_i32 : i32
  }
  func.func @transform_5(%arg0: i32) -> (i32, i32) {
    %c0_i32 = arith.constant 0 : i32
    %c0_i32_0 = arith.constant 0 : i32
    return %c0_i32, %arg0 : i32, i32
  }
}

</mosaic_0001>

<llo_original>
// kernel: tpu_custom_call.1
$region0: #{tpu_custom_call.1}
  #allocation0 [shape = 'u32[]', space=smem, size = 0x4, offset = 0x4, fixed_abs, tag = 'smem constant byte address 0x4 - core index']
  #allocation1 [shape = 'u32[144,128]{1,0:T(1,128)}', space=vmem, size = 0x12000, scoped, tag = 'internal scratch']
  #allocation2 [shape = 'f32[1]{0:T(128)S(6)}', space=smem, size = 0x200, scoped, tag = 'scoped memory for tpu_custom_call.1']
  %s0 = inlined_call_operand.vmem [shape: f32[128,128], index: 0, kind: input, shape index: {}]
  %s1 = inlined_call_operand.vmem [shape: f32[128,128], index: 1, kind: input, shape index: {}]
  %s2 = inlined_call_operand.vmem [shape: f32[128,1], index: 2, kind: input, shape index: {}]
  %s3 = inlined_call_operand.vmem [shape: f32[128,1], index: 3, kind: input, shape index: {}]
  %s4 = inlined_call_operand.<no memory space> [shape: f32[1], index: 4, kind: input, shape index: {}]
  %s5 = inlined_call_operand.hbm [shape: f32[1,128], index: 5, kind: output, shape index: {}]
  %s6 = sld [smem:[#allocation0]]
  $region30: #{tpu_custom_call.1} parent=0
    _
  %s8 = ssub.s32 1, %s6
  %s9 = scalar_select 0, %s8, %s6
  %10 = sst [smem:[#allocation2]] %s4
  $region1: #{tpu_custom_call.1} parent=0
    #allocation3 [shape = 'u8[512]{0}', space=vmem, size = 0x400, scoped, tag = 'output window, operand 0, single buffered']
    #allocation4 [shape = 's32[1]{0}', space=sflag, size = 0x4, scoped, tag = 'scoped memory for tpu_custom_call.1']
    %11 = vsyncpa [#allocation4], 0
    // Predicated region
    $region2: #{tpu_custom_call.1} parent=1 // pred_check
      _
    $region3: #{tpu_custom_call.1} parent=1 // pred_check_branch
      %13 = sbr.rel (0) target = $region5
    $region4: #{tpu_custom_call.1} parent=1 // pred_region
      _
    $region5: #{tpu_custom_call.1} parent=1 // pred_fallthru
      _
    // Predicated region
    $region6: #{tpu_custom_call.1} parent=1 // pred_check
      _
    $region7: #{tpu_custom_call.1} parent=1 // pred_check_branch
      %15 = sbr.rel (0) target = $region9
    $region8: #{tpu_custom_call.1} parent=1 // pred_region
      _
    $region9: #{tpu_custom_call.1} parent=1 // pred_fallthru
      _
    // Predicated region
    $region10: #{tpu_custom_call.1} parent=1 // pred_check
      _
    $region11: #{tpu_custom_call.1} parent=1 // pred_check_branch
      %17 = sbr.rel (0) target = $region13
    $region12: #{tpu_custom_call.1} parent=1 // pred_region
      _
    $region13: #{tpu_custom_call.1} parent=1 // pred_fallthru
      _
    // Predicated region
    $region14: #{tpu_custom_call.1} parent=1 // pred_check
      _
    $region15: #{tpu_custom_call.1} parent=1 // pred_check_branch
      %19 = sbr.rel (0) target = $region17
    $region16: #{tpu_custom_call.1} parent=1 // pred_region
      _
    $region17: #{tpu_custom_call.1} parent=1 // pred_fallthru
      _
    // Predicated region
    $region18: #{tpu_custom_call.1} parent=1 // pred_check
      _
    $region19: #{tpu_custom_call.1} parent=1 // pred_check_branch
      %21 = sbr.rel (0) target = $region21
    $region20: #{tpu_custom_call.1} parent=1 // pred_region
      _
    $region21: #{tpu_custom_call.1} parent=1 // pred_fallthru
      _
    %v22 = vld [vmem:[%s1] sm:$0xff]
    %v23 = vld [vmem:[%s1 + $0x8] sm:$0xff]
    %v24 = vld [vmem:[%s1 + $0x10] sm:$0xff]
    %v25 = vld [vmem:[%s1 + $0x18] sm:$0xff]
    %v26 = vld [vmem:[%s1 + $0x20] sm:$0xff]
    %v27 = vld [vmem:[%s1 + $0x28] sm:$0xff]
    %v28 = vld [vmem:[%s1 + $0x30] sm:$0xff]
    %v29 = vld [vmem:[%s1 + $0x38] sm:$0xff]
    %v30 = vld [vmem:[%s1 + $0x40] sm:$0xff]
    %v31 = vld [vmem:[%s1 + $0x48] sm:$0xff]
    %v32 = vld [vmem:[%s1 + $0x50] sm:$0xff]
    %v33 = vld [vmem:[%s1 + $0x58] sm:$0xff]
    %v34 = vld [vmem:[%s1 + $0x60] sm:$0xff]
    %v35 = vld [vmem:[%s1 + $0x68] sm:$0xff]
    %v36 = vld [vmem:[%s1 + $0x70] sm:$0xff]
    %v37 = vld [vmem:[%s1 + $0x78] sm:$0xff]
    %v38 = vld [vmem:[%s0] sm:$0xff]
    %v39 = vld [vmem:[%s0 + $0x8] sm:$0xff]
    %v40 = vld [vmem:[%s0 + $0x10] sm:$0xff]
    %v41 = vld [vmem:[%s0 + $0x18] sm:$0xff]
    %v42 = vld [vmem:[%s0 + $0x20] sm:$0xff]
    %v43 = vld [vmem:[%s0 + $0x28] sm:$0xff]
    %v44 = vld [vmem:[%s0 + $0x30] sm:$0xff]
    %v45 = vld [vmem:[%s0 + $0x38] sm:$0xff]
    %v46 = vld [vmem:[%s0 + $0x40] sm:$0xff]
    %v47 = vld [vmem:[%s0 + $0x48] sm:$0xff]
    %v48 = vld [vmem:[%s0 + $0x50] sm:$0xff]
    %v49 = vld [vmem:[%s0 + $0x58] sm:$0xff]
    %v50 = vld [vmem:[%s0 + $0x60] sm:$0xff]
    %v51 = vld [vmem:[%s0 + $0x68] sm:$0xff]
    %v52 = vld [vmem:[%s0 + $0x70] sm:$0xff]
    %v53 = vld [vmem:[%s0 + $0x78] sm:$0xff]
    %v54 = vld [vmem:[%s2] sm:$0xff]
    %v55 = vld [vmem:[%s2 + $0x8] sm:$0xff]
    %v56 = vld [vmem:[%s2 + $0x10] sm:$0xff]
    %v57 = vld [vmem:[%s2 + $0x18] sm:$0xff]
    %v58 = vld [vmem:[%s2 + $0x20] sm:$0xff]
    %v59 = vld [vmem:[%s2 + $0x28] sm:$0xff]
    %v60 = vld [vmem:[%s2 + $0x30] sm:$0xff]
    %v61 = vld [vmem:[%s2 + $0x38] sm:$0xff]
    %v62 = vld [vmem:[%s2 + $0x40] sm:$0xff]
    %v63 = vld [vmem:[%s2 + $0x48] sm:$0xff]
    %v64 = vld [vmem:[%s2 + $0x50] sm:$0xff]
    %v65 = vld [vmem:[%s2 + $0x58] sm:$0xff]
    %v66 = vld [vmem:[%s2 + $0x60] sm:$0xff]
    %v67 = vld [vmem:[%s2 + $0x68] sm:$0xff]
    %v68 = vld [vmem:[%s2 + $0x70] sm:$0xff]
    %v69 = vld [vmem:[%s2 + $0x78] sm:$0xff]
    %71 = vset.pattern.permute.xlu0 0
    %72 = vperm.xlu0 %71, %v54
    %v73 = vpop.permute.xlu0 %72
    %76 = vset.pattern.permute.xlu0 0
    %77 = vperm.xlu0 %76, %v55
    %v78 = vpop.permute.xlu0 %77
    %81 = vset.pattern.permute.xlu0 0
    %82 = vperm.xlu0 %81, %v56
    %v83 = vpop.permute.xlu0 %82
    %86 = vset.pattern.permute.xlu0 0
    %87 = vperm.xlu0 %86, %v57
    %v88 = vpop.permute.xlu0 %87
    %91 = vset.pattern.permute.xlu0 0
    %92 = vperm.xlu0 %91, %v58
    %v93 = vpop.permute.xlu0 %92
    %96 = vset.pattern.permute.xlu0 0
    %97 = vperm.xlu0 %96, %v59
    %v98 = vpop.permute.xlu0 %97
    %101 = vset.pattern.permute.xlu0 0
    %102 = vperm.xlu0 %101, %v60
    %v103 = vpop.permute.xlu0 %102
    %106 = vset.pattern.permute.xlu0 0
    %107 = vperm.xlu0 %106, %v61
    %v108 = vpop.permute.xlu0 %107
    %111 = vset.pattern.permute.xlu0 0
    %112 = vperm.xlu0 %111, %v62
    %v113 = vpop.permute.xlu0 %112
    %116 = vset.pattern.permute.xlu0 0
    %117 = vperm.xlu0 %116, %v63
    %v118 = vpop.permute.xlu0 %117
    %121 = vset.pattern.permute.xlu0 0
    %122 = vperm.xlu0 %121, %v64
    %v123 = vpop.permute.xlu0 %122
    %126 = vset.pattern.permute.xlu0 0
    %127 = vperm.xlu0 %126, %v65
    %v128 = vpop.permute.xlu0 %127
    %131 = vset.pattern.permute.xlu0 0
    %132 = vperm.xlu0 %131, %v66
    %v133 = vpop.permute.xlu0 %132
    %136 = vset.pattern.permute.xlu0 0
    %137 = vperm.xlu0 %136, %v67
    %v138 = vpop.permute.xlu0 %137
    %141 = vset.pattern.permute.xlu0 0
    %142 = vperm.xlu0 %141, %v68
    %v143 = vpop.permute.xlu0 %142
    %146 = vset.pattern.permute.xlu0 0
    %147 = vperm.xlu0 %146, %v69
    %v148 = vpop.permute.xlu0 %147
    %150 = vmatprep.subr.mxu0 0.0
    %151 = vmatpush1.msra.mxu0 %v38
    %152 = vmatprep.subr.mxu0 0.0
    %153 = vmatpush1.msra.mxu0 %v39
    %154 = vmatprep.subr.mxu0 0.0
    %155 = vmatpush1.msra.mxu0 %v40
    %156 = vmatprep.subr.mxu0 0.0
    %157 = vmatpush1.msra.mxu0 %v41
    %158 = vmatprep.subr.mxu0 0.0
    %159 = vmatpush1.msra.mxu0 %v42
    %160 = vmatprep.subr.mxu0 0.0
    %161 = vmatpush1.msra.mxu0 %v43
    %162 = vmatprep.subr.mxu0 0.0
    %163 = vmatpush1.msra.mxu0 %v44
    %164 = vmatprep.subr.mxu0 0.0
    %165 = vmatpush1.msra.mxu0 %v45
    %166 = vmatprep.subr.mxu0 0.0
    %167 = vmatpush1.msra.mxu0 %v46
    %168 = vmatprep.subr.mxu0 0.0
    %169 = vmatpush1.msra.mxu0 %v47
    %170 = vmatprep.subr.mxu0 0.0
    %171 = vmatpush1.msra.mxu0 %v48
    %172 = vmatprep.subr.mxu0 0.0
    %173 = vmatpush1.msra.mxu0 %v49
    %174 = vmatprep.subr.mxu0 0.0
    %175 = vmatpush1.msra.mxu0 %v50
    %176 = vmatprep.subr.mxu0 0.0
    %177 = vmatpush1.msra.mxu0 %v51
    %178 = vmatprep.subr.mxu0 0.0
    %179 = vmatpush1.msra.mxu0 %v52
    %180 = vmatprep.subr.mxu0 0.0
    %181 = vmatpush1.msra.mxu0 %v53
    %182 = vmatprep.subr.mxu0 0.0
    %183 = vmatpush1.msra.mxu0 0.0
    %184 = vmatprep.subr.mxu0 0.0
    %185 = vmatpush1.msra.mxu0 0.0
    %186 = vmatprep.subr.mxu0 0.0
    %187 = vmatpush1.msra.mxu0 0.0
    %188 = vmatprep.subr.mxu0 0.0
    %189 = vmatpush1.msra.mxu0 0.0
    %190 = vmatprep.subr.mxu0 0.0
    %191 = vmatpush1.msra.mxu0 0.0
    %192 = vmatprep.subr.mxu0 0.0
    %193 = vmatpush1.msra.mxu0 0.0
    %194 = vmatprep.subr.mxu0 0.0
    %195 = vmatpush1.msra.mxu0 0.0
    %196 = vmatprep.subr.mxu0 0.0
    %197 = vmatpush1.msra.mxu0 0.0
    %198 = vmatprep.subr.mxu0 0.0
    %199 = vmatpush1.msra.mxu0 0.0
    %200 = vmatprep.subr.mxu0 0.0
    %201 = vmatpush1.msra.mxu0 0.0
    %202 = vmatprep.subr.mxu0 0.0
    %203 = vmatpush1.msra.mxu0 0.0
    %204 = vmatprep.subr.mxu0 0.0
    %205 = vmatpush1.msra.mxu0 0.0
    %206 = vmatprep.subr.mxu0 0.0
    %207 = vmatpush1.msra.mxu0 0.0
    %208 = vmatprep.subr.mxu0 0.0
    %209 = vmatpush1.msra.mxu0 0.0
    %210 = vmatprep.subr.mxu0 0.0
    %211 = vmatpush1.msra.mxu0 0.0
    %212 = vmatprep.subr.mxu0 0.0
    %213 = vmatpush1.msra.mxu0 0.0
    %214 = vmatprep.mubr.f32.mxu0 0.0
    %215 = vmatmul.mubr.f32.gmra.mrb[0].mxu0 %v22
    %v216 = vpop.f32.mrb[0].mxu0
    %v217 = vadd.f32 %v73, %v216
    %v218 = vpop.f32.mrb[0].mxu0
    %219 = vmatprep.mubr.f32.mxu0 0.0
    %220 = vmatmul.mubr.f32.gmra.mrb[0].mxu0 %v23
    %v221 = vpop.f32.mrb[0].mxu0
    %v222 = vadd.f32 %v78, %v221
    %v223 = vpop.f32.mrb[0].mxu0
    %224 = vmatprep.mubr.f32.mxu0 0.0
    %225 = vmatmul.mubr.f32.gmra.mrb[0].mxu0 %v24
    %v226 = vpop.f32.mrb[0].mxu0
    %v227 = vadd.f32 %v83, %v226
    %v228 = vpop.f32.mrb[0].mxu0
    %229 = vmatprep.mubr.f32.mxu0 0.0
    %230 = vmatmul.mubr.f32.gmra.mrb[0].mxu0 %v25
    %v231 = vpop.f32.mrb[0].mxu0
    %v232 = vadd.f32 %v88, %v231
    %v233 = vpop.f32.mrb[0].mxu0
    %234 = vmatprep.mubr.f32.mxu0 0.0
    %235 = vmatmul.mubr.f32.gmra.mrb[0].mxu0 %v26
    %v236 = vpop.f32.mrb[0].mxu0
    %v237 = vadd.f32 %v93, %v236
    %v238 = vpop.f32.mrb[0].mxu0
    %239 = vmatprep.mubr.f32.mxu0 0.0
    %240 = vmatmul.mubr.f32.gmra.mrb[0].mxu0 %v27
    %v241 = vpop.f32.mrb[0].mxu0
    %v242 = vadd.f32 %v98, %v241
    %v243 = vpop.f32.mrb[0].mxu0
    %244 = vmatprep.mubr.f32.mxu0 0.0
    %245 = vmatmul.mubr.f32.gmra.mrb[0].mxu0 %v28
    %v246 = vpop.f32.mrb[0].mxu0
    %v247 = vadd.f32 %v103, %v246
    %v248 = vpop.f32.mrb[0].mxu0
    %249 = vmatprep.mubr.f32.mxu0 0.0
    %250 = vmatmul.mubr.f32.gmra.mrb[0].mxu0 %v29
    %v251 = vpop.f32.mrb[0].mxu0
    %v252 = vadd.f32 %v108, %v251
    %v253 = vpop.f32.mrb[0].mxu0
    %254 = vmatprep.mubr.f32.mxu0 0.0
    %255 = vmatmul.mubr.f32.gmra.mrb[0].mxu0 %v30
    %v256 = vpop.f32.mrb[0].mxu0
    %v257 = vadd.f32 %v113, %v256
    %v258 = vpop.f32.mrb[0].mxu0
    %259 = vmatprep.mubr.f32.mxu0 0.0
    %260 = vmatmul.mubr.f32.gmra.mrb[0].mxu0 %v31
    %v261 = vpop.f32.mrb[0].mxu0
    %v262 = vadd.f32 %v118, %v261
    %v263 = vpop.f32.mrb[0].mxu0
    %264 = vmatprep.mubr.f32.mxu0 0.0
    %265 = vmatmul.mubr.f32.gmra.mrb[0].mxu0 %v32
    %v266 = vpop.f32.mrb[0].mxu0
    %v267 = vadd.f32 %v123, %v266
    %v268 = vpop.f32.mrb[0].mxu0
    %269 = vmatprep.mubr.f32.mxu0 0.0
    %270 = vmatmul.mubr.f32.gmra.mrb[0].mxu0 %v33
    %v271 = vpop.f32.mrb[0].mxu0
    %v272 = vadd.f32 %v128, %v271
    %v273 = vpop.f32.mrb[0].mxu0
    %274 = vmatprep.mubr.f32.mxu0 0.0
    %275 = vmatmul.mubr.f32.gmra.mrb[0].mxu0 %v34
    %v276 = vpop.f32.mrb[0].mxu0
    %v277 = vadd.f32 %v133, %v276
    %v278 = vpop.f32.mrb[0].mxu0
    %279 = vmatprep.mubr.f32.mxu0 0.0
    %280 = vmatmul.mubr.f32.gmra.mrb[0].mxu0 %v35
    %v281 = vpop.f32.mrb[0].mxu0
    %v282 = vadd.f32 %v138, %v281
    %v283 = vpop.f32.mrb[0].mxu0
    %284 = vmatprep.mubr.f32.mxu0 0.0
    %285 = vmatmul.mubr.f32.gmra.mrb[0].mxu0 %v36
    %v286 = vpop.f32.mrb[0].mxu0
    %v287 = vadd.f32 %v143, %v286
    %v288 = vpop.f32.mrb[0].mxu0
    %289 = vmatprep.mubr.f32.mxu0 0.0
    %290 = vmatmul.mubr.f32.gmra.mrb[0].mxu0 %v37
    %v291 = vpop.f32.mrb[0].mxu0
    %v292 = vadd.f32 %v148, %v291
    %v293 = vpop.f32.mrb[0].mxu0
    %294 = vdwg.mxu0
    %vm295 = vcmp.ge.f32.partialorder %v217, 0.0
    %vm296 = vcmp.ge.f32.partialorder %v222, 0.0
    %vm297 = vcmp.ge.f32.partialorder %v227, 0.0
    %vm298 = vcmp.ge.f32.partialorder %v232, 0.0
    %vm299 = vcmp.ge.f32.partialorder %v237, 0.0
    %vm300 = vcmp.ge.f32.partialorder %v242, 0.0
    %vm301 = vcmp.ge.f32.partialorder %v247, 0.0
    %vm302 = vcmp.ge.f32.partialorder %v252, 0.0
    %vm303 = vcmp.ge.f32.partialorder %v257, 0.0
    %vm304 = vcmp.ge.f32.partialorder %v262, 0.0
    %vm305 = vcmp.ge.f32.partialorder %v267, 0.0
    %vm306 = vcmp.ge.f32.partialorder %v272, 0.0
    %vm307 = vcmp.ge.f32.partialorder %v277, 0.0
    %vm308 = vcmp.ge.f32.partialorder %v282, 0.0
    %vm309 = vcmp.ge.f32.partialorder %v287, 0.0
    %vm310 = vcmp.ge.f32.partialorder %v292, 0.0
    %v311 = vmul.f32 %v217, 0.01
    %v312 = vmul.f32 %v222, 0.01
    %v313 = vmul.f32 %v227, 0.01
    %v314 = vmul.f32 %v232, 0.01
    %v315 = vmul.f32 %v237, 0.01
    %v316 = vmul.f32 %v242, 0.01
    %v317 = vmul.f32 %v247, 0.01
    %v318 = vmul.f32 %v252, 0.01
    %v319 = vmul.f32 %v257, 0.01
    %v320 = vmul.f32 %v262, 0.01
    %v321 = vmul.f32 %v267, 0.01
    %v322 = vmul.f32 %v272, 0.01
    %v323 = vmul.f32 %v277, 0.01
    %v324 = vmul.f32 %v282, 0.01
    %v325 = vmul.f32 %v287, 0.01
    %v326 = vmul.f32 %v292, 0.01
    %v327 = vsel %vm295, %v217, %v311
    %v328 = vsel %vm296, %v222, %v312
    %v329 = vsel %vm297, %v227, %v313
    %v330 = vsel %vm298, %v232, %v314
    %v331 = vsel %vm299, %v237, %v315
    %v332 = vsel %vm300, %v242, %v316
    %v333 = vsel %vm301, %v247, %v317
    %v334 = vsel %vm302, %v252, %v318
    %v335 = vsel %vm303, %v257, %v319
    %v336 = vsel %vm304, %v262, %v320
    %v337 = vsel %vm305, %v267, %v321
    %v338 = vsel %vm306, %v272, %v322
    %v339 = vsel %vm307, %v277, %v323
    %v340 = vsel %vm308, %v282, %v324
    %v341 = vsel %vm309, %v287, %v325
    %v342 = vsel %vm310, %v292, %v326
    %v343 = vld [vmem:[%s3] sm:$0xff]
    %v344 = vld [vmem:[%s3 + $0x8] sm:$0xff]
    %v345 = vld [vmem:[%s3 + $0x10] sm:$0xff]
    %v346 = vld [vmem:[%s3 + $0x18] sm:$0xff]
    %v347 = vld [vmem:[%s3 + $0x20] sm:$0xff]
    %v348 = vld [vmem:[%s3 + $0x28] sm:$0xff]
    %v349 = vld [vmem:[%s3 + $0x30] sm:$0xff]
    %v350 = vld [vmem:[%s3 + $0x38] sm:$0xff]
    %v351 = vld [vmem:[%s3 + $0x40] sm:$0xff]
    %v352 = vld [vmem:[%s3 + $0x48] sm:$0xff]
    %v353 = vld [vmem:[%s3 + $0x50] sm:$0xff]
    %v354 = vld [vmem:[%s3 + $0x58] sm:$0xff]
    %v355 = vld [vmem:[%s3 + $0x60] sm:$0xff]
    %v356 = vld [vmem:[%s3 + $0x68] sm:$0xff]
    %v357 = vld [vmem:[%s3 + $0x70] sm:$0xff]
    %v358 = vld [vmem:[%s3 + $0x78] sm:$0xff]
    %360 = vset.pattern.permute.xlu0 0
    %361 = vperm.xlu0 %360, %v343
    %v362 = vpop.permute.xlu0 %361
    %365 = vset.pattern.permute.xlu0 0
    %366 = vperm.xlu0 %365, %v344
    %v367 = vpop.permute.xlu0 %366
    %370 = vset.pattern.permute.xlu0 0
    %371 = vperm.xlu0 %370, %v345
    %v372 = vpop.permute.xlu0 %371
    %375 = vset.pattern.permute.xlu0 0
    %376 = vperm.xlu0 %375, %v346
    %v377 = vpop.permute.xlu0 %376
    %380 = vset.pattern.permute.xlu0 0
    %381 = vperm.xlu0 %380, %v347
    %v382 = vpop.permute.xlu0 %381
    %385 = vset.pattern.permute.xlu0 0
    %386 = vperm.xlu0 %385, %v348
    %v387 = vpop.permute.xlu0 %386
    %390 = vset.pattern.permute.xlu0 0
    %391 = vperm.xlu0 %390, %v349
    %v392 = vpop.permute.xlu0 %391
    %395 = vset.pattern.permute.xlu0 0
    %396 = vperm.xlu0 %395, %v350
    %v397 = vpop.permute.xlu0 %396
    %400 = vset.pattern.permute.xlu0 0
    %401 = vperm.xlu0 %400, %v351
    %v402 = vpop.permute.xlu0 %401
    %405 = vset.pattern.permute.xlu0 0
    %406 = vperm.xlu0 %405, %v352
    %v407 = vpop.permute.xlu0 %406
    %410 = vset.pattern.permute.xlu0 0
    %411 = vperm.xlu0 %410, %v353
    %v412 = vpop.permute.xlu0 %411
    %415 = vset.pattern.permute.xlu0 0
    %416 = vperm.xlu0 %415, %v354
    %v417 = vpop.permute.xlu0 %416
    %420 = vset.pattern.permute.xlu0 0
    %421 = vperm.xlu0 %420, %v355
    %v422 = vpop.permute.xlu0 %421
    %425 = vset.pattern.permute.xlu0 0
    %426 = vperm.xlu0 %425, %v356
    %v427 = vpop.permute.xlu0 %426
    %430 = vset.pattern.permute.xlu0 0
    %431 = vperm.xlu0 %430, %v357
    %v432 = vpop.permute.xlu0 %431
    %435 = vset.pattern.permute.xlu0 0
    %436 = vperm.xlu0 %435, %v358
    %v437 = vpop.permute.xlu0 %436
    %v439 = vmul.f32 %v327, %v362
    %v440 = vmul.f32 %v328, %v367
    %v441 = vmul.f32 %v329, %v372
    %v442 = vmul.f32 %v330, %v377
    %v443 = vmul.f32 %v331, %v382
    %v444 = vmul.f32 %v332, %v387
    %v445 = vmul.f32 %v333, %v392
    %v446 = vmul.f32 %v334, %v397
    %v447 = vmul.f32 %v335, %v402
    %v448 = vmul.f32 %v336, %v407
    %v449 = vmul.f32 %v337, %v412
    %v450 = vmul.f32 %v338, %v417
    %v451 = vmul.f32 %v339, %v422
    %v452 = vmul.f32 %v340, %v427
    %v453 = vmul.f32 %v341, %v432
    %v454 = vmul.f32 %v342, %v437
    %v455 = vadd.f32 %v439, %v440
    %v456 = vadd.f32 %v455, %v441
    %v457 = vadd.f32 %v456, %v442
    %v458 = vadd.f32 %v457, %v443
    %v459 = vadd.f32 %v458, %v444
    %v460 = vadd.f32 %v459, %v445
    %v461 = vadd.f32 %v460, %v446
    %v462 = vadd.f32 %v461, %v447
    %v463 = vadd.f32 %v462, %v448
    %v464 = vadd.f32 %v463, %v449
    %v465 = vadd.f32 %v464, %v450
    %v466 = vadd.f32 %v465, %v451
    %v467 = vadd.f32 %v466, %v452
    %v468 = vadd.f32 %v467, %v453
    %v469 = vadd.f32 %v468, %v454
    %v470 = vrot.slane %v469, 4
    %v471 = vadd.f32 %v469, %v470
    %v472 = vrot.slane %v471, 2
    %v473 = vadd.f32 %v471, %v472
    %v474 = vrot.slane %v473, 1
    %v475 = vadd.f32 %v473, %v474
    %s476 = sld [smem:[#allocation2]]
    %v477 = vstv %s476
    %v478 = vadd.f32 %v475, %v477
    %479 = vst [vmem:[#allocation3] sm:$0x1] %v478
    // Predicated region
    $region22: #{tpu_custom_call.1} parent=1 // pred_check
      _
    $region23: #{tpu_custom_call.1} parent=1 // pred_check_branch
      %481 = sbr.rel (0) target = $region25
    $region24: #{tpu_custom_call.1} parent=1 // pred_region
      %s483 = ssub.s32 16, 16
      %484 = vsyncadd [#allocation4], %s483
      %s486 = sshll.u32 [#allocation3], 4
      %s487 = int_to_ptr.vmem [resolvable:$true] %s486
      %489 = dma.vmem_to_hbm [thread:$0]  %s487, 16, %s5, [#allocation4]
    $region25: #{tpu_custom_call.1} parent=1 // pred_fallthru
      _
    // Predicated region
    $region26: #{tpu_custom_call.1} parent=1 // pred_check
      _
    $region27: #{tpu_custom_call.1} parent=1 // pred_check_branch
      %491 = sbr.rel (0) target = $region29
    $region28: #{tpu_custom_call.1} parent=1 // pred_region
      %492 = dma.done [#allocation4], 16
    $region29: #{tpu_custom_call.1} parent=1 // pred_fallthru
      _
    %493 = vsyncpa [#allocation4], 1

</llo_original>
